<compile_context>
chip_gen: v5e
topology: v5e:2x2
jax: 0.10.0
libtpu: 0.0.40
codegen_flags: <defaults>
</compile_context>

<pallas_src>
import functools

import jax
import jax.numpy as jnp
from jax.experimental import pallas as pl
from jax.experimental.pallas import tpu as pltpu

LANE = 128
SUBLANE = 8


def _round_up(x, m):
    return ((x + m - 1) // m) * m


def deep_basic_kernel(ids_ref, ftab_t_ref, wfc_t_ref, out_ref, *, ones_row):
    # ids_ref   : (S, TB)   int32  token ids, batch on the 128-lane axis
    # ftab_t_ref: (Hp, Vp)  f32    ((w_emb @ w_enc)/S)^T, enc bias in col `ones_row`,
    #                              1.0 at (H, ones_row) to feed the fc bias
    # wfc_t_ref : (Cs, Hp)  f32    w_fc^T, fc bias in column H
    # out_ref   : (Cs, TB)  f32    transposed logits, lane-dense (no padded lanes)
    ids = ids_ref[...]                                   # (S, TB) int32
    S, TB = ids.shape
    Vp = ftab_t_ref.shape[1]

    # Per-column token histogram: counts[v, b] = #{s : ids[s, b] == v}.
    # Initialized with the constant-1 bias-feed row (sublane == ones_row).
    sub_iota = jax.lax.broadcasted_iota(jnp.int32, (Vp, TB), 0)
    counts = (sub_iota == ones_row).astype(jnp.int32)
    if S <= 16:
        # Static unroll: each step is a sublane broadcast + VPU compare/add.
        for s in range(S):
            counts = counts + (ids[s:s + 1, :] == sub_iota).astype(jnp.int32)
    else:
        def body(s, c):
            row = jax.lax.dynamic_slice_in_dim(ids, s, 1, axis=0)   # (1, TB)
            return c + (row == sub_iota).astype(jnp.int32)
        counts = jax.lax.fori_loop(0, S, body, counts, unroll=8)

    counts_f = counts.astype(jnp.float32)                # single convert

    # gather + mean-pool + encoder Linear (+ enc bias) as one MXU matmul.
    pooled_t = jnp.dot(ftab_t_ref[...], counts_f,
                       preferred_element_type=jnp.float32)   # (Hp, TB)
    h_t = jnp.maximum(pooled_t, 0.0)                     # ReLU; bias-feed row stays 1.0
    # fc Linear (+ fc bias) as one MXU matmul, written lane-dense.
    out_ref[...] = jnp.dot(wfc_t_ref[...], h_t,
                           preferred_element_type=jnp.float32)


def deep_basic_forward(basic, w_emb_table, w_enc, b_enc, w_fc, b_fc, block_b=512):
    """basic: (B, S) int32 token ids. Returns logits (B, C) f32."""
    B, S = basic.shape
    V, _E = w_emb_table.shape
    H = w_enc.shape[1]
    C = w_fc.shape[1]
    f32 = jnp.float32

    Vp = _round_up(V + 1, LANE)      # vocab + bias-feed row, full-MXU K
    Hp = _round_up(H + 1, LANE)      # hidden + fc-bias-ones row, full-MXU K
    Cs = _round_up(C, SUBLANE)       # class sublanes (batch lives on lanes)

    b_enc_v = jnp.reshape(b_enc, (H,)).astype(f32)
    b_fc_v = jnp.reshape(b_fc, (C,)).astype(f32)

    # Fused, transposed table: pooled^T = ftab_t @ counts  (biases folded in).
    ftab = (w_emb_table.astype(f32) @ w_enc.astype(f32)) * (1.0 / S)   # (V, H)
    ftab_t = jnp.zeros((Hp, Vp), f32)
    ftab_t = ftab_t.at[:H, :V].set(ftab.T)
    ftab_t = ftab_t.at[:H, V].set(b_enc_v)      # encoder bias column
    ftab_t = ftab_t.at[H, V].set(1.0)           # feeds fc bias through the ReLU

    wfc_t = jnp.zeros((Cs, Hp), f32)
    wfc_t = wfc_t.at[:C, :H].set(w_fc.astype(f32).T)
    wfc_t = wfc_t.at[:C, H].set(b_fc_v)         # fc bias column

    # Batch tiling: batch on the lane axis, large tiles to amortize per-step
    # overhead; for B > block_b the grid has >= 2 tiles (v7x megacore sharding).
    block_b = _round_up(block_b, LANE)
    Bp128 = _round_up(max(B, 1), LANE)
    if Bp128 <= block_b:
        TB = Bp128
        Bp = Bp128
    else:
        TB = block_b
        Bp = _round_up(B, TB)

    # (S, Bp): lane-dense ids DMA; pad columns hold token 0 and are sliced off.
    ids_t = jnp.pad(basic.astype(jnp.int32).T, ((0, 0), (0, Bp - B)))

    grid = (Bp // TB,)
    flops = 2 * Bp * (Vp * Hp + Hp * Cs)
    bytes_accessed = 4 * (S * Bp + Hp * Vp + Cs * Hp + Cs * Bp)

    kernel = functools.partial(deep_basic_kernel, ones_row=V)

    out_t = pl.pallas_call(
        kernel,
        out_shape=jax.ShapeDtypeStruct((Cs, Bp), f32),
        grid_spec=pltpu.PrefetchScalarGridSpec(
            num_scalar_prefetch=0,
            grid=grid,
            in_specs=[
                pl.BlockSpec((S, TB), lambda i: (0, i)),    # ids: batch-tiled on lanes
                pl.BlockSpec((Hp, Vp), lambda i: (0, 0)),   # fused table: VMEM-resident
                pl.BlockSpec((Cs, Hp), lambda i: (0, 0)),   # fc weight^T: VMEM-resident
            ],
            out_specs=pl.BlockSpec((Cs, TB), lambda i: (0, i)),
        ),
        compiler_params=pltpu.CompilerParams(
            dimension_semantics=("parallel",)),
        cost_estimate=pl.CostEstimate(
            flops=flops, transcendentals=0, bytes_accessed=bytes_accessed),
    )(ids_t, ftab_t, wfc_t)

    # Tiny (C, B) -> (B, C) reorientation; no padded-lane re-read.
    return out_t[:C, :B].T


if __name__ == "__main__":
    # Small, deterministic config
    VOCAB, EMB, HID, NCLS = 64, 32, 32, 16
    B, S = 2, 8

    key = jax.random.PRNGKey(0)
    k_emb, k_we, k_be, k_wf, k_bf, k_ids = jax.random.split(key, 6)

    w_emb_table = jax.random.normal(k_emb, (VOCAB, EMB), jnp.float32) * 0.1
    w_enc = jax.random.normal(k_we, (EMB, HID), jnp.float32) * 0.1
    b_enc = jax.random.normal(k_be, (1, HID), jnp.float32) * 0.1
    w_fc = jax.random.normal(k_wf, (HID, NCLS), jnp.float32) * 0.1
    b_fc = jax.random.normal(k_bf, (1, NCLS), jnp.float32) * 0.1

    basic = jax.random.randint(k_ids, (B, S), 0, VOCAB, jnp.int32)

    logits = deep_basic_forward(basic, w_emb_table, w_enc, b_enc, w_fc, b_fc)
    logits = jax.block_until_ready(logits)

    # Reference check in plain JAX (same math as the PyTorch non-HYBRID path)
    emb_ref = jnp.take(w_emb_table, basic, axis=0)
    pooled_ref = jnp.mean(emb_ref, axis=1)
    h_ref = jnp.maximum(pooled_ref @ w_enc + b_enc, 0.0)
    logits_ref = h_ref @ w_fc + b_fc
    assert logits.shape == logits_ref.shape
    assert jnp.allclose(logits, logits_ref, atol=1e-5, rtol=1e-5)

    print("KERNEL_OK")
</pallas_src>

<mosaic_0001>
module attributes {stable_mosaic.version = 11 : i64} {
  func.func @deep_basic_kernel(%arg0: i32, %arg1: memref<8x128xi32, #tpu.memory_space<vmem>>, %arg2: memref<128x128xf32, #tpu.memory_space<vmem>>, %arg3: memref<16x128xf32, #tpu.memory_space<vmem>>, %arg4: memref<16x128xf32, #tpu.memory_space<vmem>>) attributes {dimension_semantics = [#tpu.dimension_semantics<parallel>], iteration_bounds = array<i64: 1>, scalar_prefetch = 0 : i64, scratch_operands = 0 : i64, tpu.core_type = #tpu.core_type<tc>, window_params = [{transform_indices = @transform_0, window_bounds = array<i64: 8, 128>}, {pipeline_mode = #tpu.pipeline_mode<synchronous>, transform_indices = @transform_1, window_bounds = array<i64: 128, 128>}, {pipeline_mode = #tpu.pipeline_mode<synchronous>, transform_indices = @transform_2, window_bounds = array<i64: 16, 128>}, {transform_indices = @transform_3, window_bounds = array<i64: 16, 128>}]} {
    %c0 = arith.constant 0 : index
    %c0_0 = arith.constant 0 : index
    %0 = vector.load %arg1[%c0, %c0_0] : memref<8x128xi32, #tpu.memory_space<vmem>>, vector<8x128xi32>
    %1 = tpu.iota {dimensions = array<i32: 0>} : vector<128x128xi32>
    %c64_i32 = arith.constant 64 : i32
    %2 = vector.broadcast %c64_i32 : i32 to vector<128x128xi32>
    %3 = arith.cmpi eq, %1, %2 : vector<128x128xi32>
    %4 = arith.extui %3 : vector<128x128xi1> to vector<128x128xi32>
    %5 = vector.extract_strided_slice %0 {offsets = [0, 0], sizes = [1, 128], strides = [1, 1]} : vector<8x128xi32> to vector<1x128xi32>
    %6 = vector.broadcast %5 : vector<1x128xi32> to vector<128x128xi32>
    %7 = arith.cmpi eq, %6, %1 : vector<128x128xi32>
    %8 = arith.extui %7 : vector<128x128xi1> to vector<128x128xi32>
    %9 = arith.addi %4, %8 : vector<128x128xi32>
    %10 = vector.extract_strided_slice %0 {offsets = [1, 0], sizes = [1, 128], strides = [1, 1]} : vector<8x128xi32> to vector<1x128xi32>
    %11 = vector.broadcast %10 : vector<1x128xi32> to vector<128x128xi32>
    %12 = arith.cmpi eq, %11, %1 : vector<128x128xi32>
    %13 = arith.extui %12 : vector<128x128xi1> to vector<128x128xi32>
    %14 = arith.addi %9, %13 : vector<128x128xi32>
    %15 = vector.extract_strided_slice %0 {offsets = [2, 0], sizes = [1, 128], strides = [1, 1]} : vector<8x128xi32> to vector<1x128xi32>
    %16 = vector.broadcast %15 : vector<1x128xi32> to vector<128x128xi32>
    %17 = arith.cmpi eq, %16, %1 : vector<128x128xi32>
    %18 = arith.extui %17 : vector<128x128xi1> to vector<128x128xi32>
    %19 = arith.addi %14, %18 : vector<128x128xi32>
    %20 = vector.extract_strided_slice %0 {offsets = [3, 0], sizes = [1, 128], strides = [1, 1]} : vector<8x128xi32> to vector<1x128xi32>
    %21 = vector.broadcast %20 : vector<1x128xi32> to vector<128x128xi32>
    %22 = arith.cmpi eq, %21, %1 : vector<128x128xi32>
    %23 = arith.extui %22 : vector<128x128xi1> to vector<128x128xi32>
    %24 = arith.addi %19, %23 : vector<128x128xi32>
    %25 = vector.extract_strided_slice %0 {offsets = [4, 0], sizes = [1, 128], strides = [1, 1]} : vector<8x128xi32> to vector<1x128xi32>
    %26 = vector.broadcast %25 : vector<1x128xi32> to vector<128x128xi32>
    %27 = arith.cmpi eq, %26, %1 : vector<128x128xi32>
    %28 = arith.extui %27 : vector<128x128xi1> to vector<128x128xi32>
    %29 = arith.addi %24, %28 : vector<128x128xi32>
    %30 = vector.extract_strided_slice %0 {offsets = [5, 0], sizes = [1, 128], strides = [1, 1]} : vector<8x128xi32> to vector<1x128xi32>
    %31 = vector.broadcast %30 : vector<1x128xi32> to vector<128x128xi32>
    %32 = arith.cmpi eq, %31, %1 : vector<128x128xi32>
    %33 = arith.extui %32 : vector<128x128xi1> to vector<128x128xi32>
    %34 = arith.addi %29, %33 : vector<128x128xi32>
    %35 = vector.extract_strided_slice %0 {offsets = [6, 0], sizes = [1, 128], strides = [1, 1]} : vector<8x128xi32> to vector<1x128xi32>
    %36 = vector.broadcast %35 : vector<1x128xi32> to vector<128x128xi32>
    %37 = arith.cmpi eq, %36, %1 : vector<128x128xi32>
    %38 = arith.extui %37 : vector<128x128xi1> to vector<128x128xi32>
    %39 = arith.addi %34, %38 : vector<128x128xi32>
    %40 = vector.extract_strided_slice %0 {offsets = [7, 0], sizes = [1, 128], strides = [1, 1]} : vector<8x128xi32> to vector<1x128xi32>
    %41 = vector.broadcast %40 : vector<1x128xi32> to vector<128x128xi32>
    %42 = arith.cmpi eq, %41, %1 : vector<128x128xi32>
    %43 = arith.extui %42 : vector<128x128xi1> to vector<128x128xi32>
    %44 = arith.addi %39, %43 : vector<128x128xi32>
    %45 = arith.sitofp %44 : vector<128x128xi32> to vector<128x128xf32>
    %c0_1 = arith.constant 0 : index
    %c0_2 = arith.constant 0 : index
    %46 = vector.load %arg2[%c0_1, %c0_2] : memref<128x128xf32, #tpu.memory_space<vmem>>, vector<128x128xf32>
    %cst = arith.constant dense<0.000000e+00> : vector<128x128xf32>
    %47 = tpu.matmul %46, %45, %cst {dimension_numbers = #tpu.dot_dimension_numbers<[1], [0], [0], [1], [0, 0, 1, 1], [], []>} : vector<128x128xf32>, vector<128x128xf32>, vector<128x128xf32> -> vector<128x128xf32>
    %cst_3 = arith.constant 0.000000e+00 : f32
    %48 = vector.broadcast %cst_3 : f32 to vector<128x128xf32>
    %49 = arith.maximumf %47, %48 : vector<128x128xf32>
    %c0_4 = arith.constant 0 : index
    %c0_5 = arith.constant 0 : index
    %50 = vector.load %arg3[%c0_4, %c0_5] : memref<16x128xf32, #tpu.memory_space<vmem>>, vector<16x128xf32>
    %cst_6 = arith.constant dense<0.000000e+00> : vector<16x128xf32>
    %51 = tpu.matmul %50, %49, %cst_6 {dimension_numbers = #tpu.dot_dimension_numbers<[1], [0], [0], [1], [0, 0, 1, 1], [], []>} : vector<16x128xf32>, vector<128x128xf32>, vector<16x128xf32> -> vector<16x128xf32>
    %c0_7 = arith.constant 0 : index
    %c0_8 = arith.constant 0 : index
    %52 = vector.load %arg4[%c0_7, %c0_8] : memref<16x128xf32, #tpu.memory_space<vmem>>, vector<16x128xf32>
    tpu.vector_store %arg4[%c0_7, %c0_8], %51 {strides = array<i32>} : memref<16x128xf32, #tpu.memory_space<vmem>>, vector<16x128xf32>,
    return
  }
  func.func @transform_0(%arg0: i32) -> (i32, i32) {
    %c0_i32 = arith.constant 0 : i32
    %c0_i32_0 = arith.constant 0 : i32
    return %c0_i32, %arg0 : i32, i32
  }
  func.func @transform_1(%arg0: i32) -> (i32, i32) {
    %c0_i32 = arith.constant 0 : i32
    %c0_i32_0 = arith.constant 0 : i32
    %c0_i32_1 = arith.constant 0 : i32
    return %c0_i32, %c0_i32_0 : i32, i32
  }
  func.func @transform_2(%arg0: i32) -> (i32, i32) {
    %c0_i32 = arith.constant 0 : i32
    %c0_i32_0 = arith.constant 0 : i32
    %c0_i32_1 = arith.constant 0 : i32
    return %c0_i32, %c0_i32_0 : i32, i32
  }
  func.func @transform_3(%arg0: i32) -> (i32, i32) {
    %c0_i32 = arith.constant 0 : i32
    %c0_i32_0 = arith.constant 0 : i32
    return %c0_i32, %arg0 : i32, i32
  }
}

</mosaic_0001>

<llo_original>
// kernel: tpu_custom_call.1
$region0: #{tpu_custom_call.1}
  #allocation0 [shape = 'u32[]', space=smem, size = 0x4, offset = 0x4, fixed_abs, tag = 'smem constant byte address 0x4 - core index']
  #allocation1 [shape = 'u32[72,128]{1,0:T(1,128)}', space=vmem, size = 0x9000, scoped, tag = 'internal scratch']
  %s0 = inlined_call_operand.hbm [shape: s32[8,128], index: 0, kind: input, shape index: {}]
  %s1 = inlined_call_operand.hbm [shape: f32[128,128], index: 1, kind: input, shape index: {}]
  %s2 = inlined_call_operand.hbm [shape: f32[16,128], index: 2, kind: input, shape index: {}]
  %s3 = inlined_call_operand.hbm [shape: f32[16,128], index: 3, kind: output, shape index: {}]
  %s4 = sld [smem:[#allocation0]]
  $region34: #{tpu_custom_call.1} parent=0
    _
  %s6 = ssub.s32 1, %s4
  %s7 = scalar_select 0, %s6, %s4
  $region1: #{tpu_custom_call.1} parent=0
    #allocation2 [shape = 'u8[4096]{0}', space=vmem, size = 0x1000, scoped, tag = 'input window, operand 0, single buffered']
    #allocation3 [shape = 's32[1]{0}', space=sflag, size = 0x4, scoped, tag = 'scoped memory for tpu_custom_call.1']
    #allocation4 [shape = 's32[1]{0}', space=sflag, size = 0x4, scoped, tag = 'scoped memory for tpu_custom_call.1']
    #allocation5 [shape = 'u8[65536]{0}', space=vmem, size = 0x10000, scoped, tag = 'input window, operand 1, single buffered']
    #allocation6 [shape = 's32[1]{0}', space=sflag, size = 0x4, scoped, tag = 'scoped memory for tpu_custom_call.1']
    #allocation7 [shape = 'u8[8192]{0}', space=vmem, size = 0x2000, scoped, tag = 'input window, operand 2, single buffered']
    #allocation8 [shape = 'u8[8192]{0}', space=vmem, size = 0x2000, scoped, tag = 'output window, operand 0, single buffered']
    %8 = vsyncpa [#allocation3], 0
    %9 = vsyncpa [#allocation6], 0
    %10 = vsyncpa [#allocation4], 0
    // Predicated region
    $region2: #{tpu_custom_call.1} parent=1 // pred_check
      _
    $region3: #{tpu_custom_call.1} parent=1 // pred_check_branch
      %12 = sbr.rel (0) target = $region5
    $region4: #{tpu_custom_call.1} parent=1 // pred_region
      %14 = vsyncadd [#allocation3], 0
      %s16 = sshll.u32 %s0, 4
      %s17 = int_to_ptr.hbm [resolvable:$true] %s16
      %s18 = sshll.u32 [#allocation2], 4
      %s19 = int_to_ptr.vmem [resolvable:$true] %s18
      %21 = dma.hbm_to_vmem [thread:$0]  %s17, 128, %s19, [#allocation3]
    $region5: #{tpu_custom_call.1} parent=1 // pred_fallthru
      _
    // Predicated region
    $region6: #{tpu_custom_call.1} parent=1 // pred_check
      _
    $region7: #{tpu_custom_call.1} parent=1 // pred_check_branch
      %23 = sbr.rel (0) target = $region9
    $region8: #{tpu_custom_call.1} parent=1 // pred_region
      %25 = vsyncadd [#allocation6], 0
      %s26 = sshll.u32 %s1, 4
      %s27 = int_to_ptr.hbm [resolvable:$true] %s26
      %s28 = sshll.u32 [#allocation5], 4
      %s29 = int_to_ptr.vmem [resolvable:$true] %s28
      %34 = dma.hbm_to_vmem [thread:$0]  %s27, 2048, %s29, [#allocation6], 128, 128, 8
    $region9: #{tpu_custom_call.1} parent=1 // pred_fallthru
      _
    // Predicated region
    $region10: #{tpu_custom_call.1} parent=1 // pred_check
      _
    $region11: #{tpu_custom_call.1} parent=1 // pred_check_branch
      %36 = sbr.rel (0) target = $region13
    $region12: #{tpu_custom_call.1} parent=1 // pred_region
      %38 = vsyncadd [#allocation6], 0
      %s39 = sshll.u32 %s2, 4
      %s40 = int_to_ptr.hbm [resolvable:$true] %s39
      %s41 = sshll.u32 [#allocation7], 4
      %s42 = int_to_ptr.vmem [resolvable:$true] %s41
      %47 = dma.hbm_to_vmem [thread:$0]  %s40, 256, %s42, [#allocation6], 128, 128, 8
    $region13: #{tpu_custom_call.1} parent=1 // pred_fallthru
      _
    // Predicated region
    $region14: #{tpu_custom_call.1} parent=1 // pred_check
      _
    $region15: #{tpu_custom_call.1} parent=1 // pred_check_branch
      %49 = sbr.rel (0) target = $region17
    $region16: #{tpu_custom_call.1} parent=1 // pred_region
      %51 = dma.done [#allocation3], 128
    $region17: #{tpu_custom_call.1} parent=1 // pred_fallthru
      _
    // Predicated region
    $region18: #{tpu_custom_call.1} parent=1 // pred_check
      _
    $region19: #{tpu_custom_call.1} parent=1 // pred_check_branch
      %53 = sbr.rel (0) target = $region21
    $region20: #{tpu_custom_call.1} parent=1 // pred_region
      %55 = dma.done [#allocation6], 2048
    $region21: #{tpu_custom_call.1} parent=1 // pred_fallthru
      _
    // Predicated region
    $region22: #{tpu_custom_call.1} parent=1 // pred_check
      _
    $region23: #{tpu_custom_call.1} parent=1 // pred_check_branch
      %57 = sbr.rel (0) target = $region25
    $region24: #{tpu_custom_call.1} parent=1 // pred_region
      %59 = dma.done [#allocation6], 256
    $region25: #{tpu_custom_call.1} parent=1 // pred_fallthru
      _
    %v60 = vld [vmem:[#allocation2] sm:$0xff]
    %v61 = vlaneseq
    %v62 = vshrl.u32 %v61, 7
    %v63 = vadd.s32 %v62, 8
    %v64 = vadd.s32 %v62, 16
    %v65 = vadd.s32 %v62, 24
    %v66 = vadd.s32 %v62, 32
    %v67 = vadd.s32 %v62, 40
    %v68 = vadd.s32 %v62, 48
    %v69 = vadd.s32 %v62, 56
    %v70 = vadd.s32 %v62, 64
    %v71 = vadd.s32 %v62, 72
    %v72 = vadd.s32 %v62, 80
    %v73 = vadd.s32 %v62, 88
    %v74 = vadd.s32 %v62, 96
    %v75 = vadd.s32 %v62, 104
    %v76 = vadd.s32 %v62, 112
    %v77 = vadd.s32 %v62, 120
    %vm78 = vcmp.eq.s32.totalorder %v62, 64
    %vm79 = vcmp.eq.s32.totalorder %v63, 64
    %vm80 = vcmp.eq.s32.totalorder %v64, 64
    %vm81 = vcmp.eq.s32.totalorder %v65, 64
    %vm82 = vcmp.eq.s32.totalorder %v66, 64
    %vm83 = vcmp.eq.s32.totalorder %v67, 64
    %vm84 = vcmp.eq.s32.totalorder %v68, 64
    %vm85 = vcmp.eq.s32.totalorder %v69, 64
    %vm86 = vcmp.eq.s32.totalorder %v70, 64
    %vm87 = vcmp.eq.s32.totalorder %v71, 64
    %vm88 = vcmp.eq.s32.totalorder %v72, 64
    %vm89 = vcmp.eq.s32.totalorder %v73, 64
    %vm90 = vcmp.eq.s32.totalorder %v74, 64
    %vm91 = vcmp.eq.s32.totalorder %v75, 64
    %vm92 = vcmp.eq.s32.totalorder %v76, 64
    %vm93 = vcmp.eq.s32.totalorder %v77, 64
    %v94 = vsel %vm78, 1, 0
    %v95 = vsel %vm79, 1, 0
    %v96 = vsel %vm80, 1, 0
    %v97 = vsel %vm81, 1, 0
    %v98 = vsel %vm82, 1, 0
    %v99 = vsel %vm83, 1, 0
    %v100 = vsel %vm84, 1, 0
    %v101 = vsel %vm85, 1, 0
    %v102 = vsel %vm86, 1, 0
    %v103 = vsel %vm87, 1, 0
    %v104 = vsel %vm88, 1, 0
    %v105 = vsel %vm89, 1, 0
    %v106 = vsel %vm90, 1, 0
    %v107 = vsel %vm91, 1, 0
    %v108 = vsel %vm92, 1, 0
    %v109 = vsel %vm93, 1, 0
    %v110 = vperm.slane %v60, 0
    %vm111 = vcmp.eq.s32.totalorder %v110, %v62
    %vm112 = vcmp.eq.s32.totalorder %v110, %v63
    %vm113 = vcmp.eq.s32.totalorder %v110, %v64
    %vm114 = vcmp.eq.s32.totalorder %v110, %v65
    %vm115 = vcmp.eq.s32.totalorder %v110, %v66
    %vm116 = vcmp.eq.s32.totalorder %v110, %v67
    %vm117 = vcmp.eq.s32.totalorder %v110, %v68
    %vm118 = vcmp.eq.s32.totalorder %v110, %v69
    %vm119 = vcmp.eq.s32.totalorder %v110, %v70
    %vm120 = vcmp.eq.s32.totalorder %v110, %v71
    %vm121 = vcmp.eq.s32.totalorder %v110, %v72
    %vm122 = vcmp.eq.s32.totalorder %v110, %v73
    %vm123 = vcmp.eq.s32.totalorder %v110, %v74
    %vm124 = vcmp.eq.s32.totalorder %v110, %v75
    %vm125 = vcmp.eq.s32.totalorder %v110, %v76
    %vm126 = vcmp.eq.s32.totalorder %v110, %v77
    %v127 = vsel %vm111, 1, 0
    %v128 = vsel %vm112, 1, 0
    %v129 = vsel %vm113, 1, 0
    %v130 = vsel %vm114, 1, 0
    %v131 = vsel %vm115, 1, 0
    %v132 = vsel %vm116, 1, 0
    %v133 = vsel %vm117, 1, 0
    %v134 = vsel %vm118, 1, 0
    %v135 = vsel %vm119, 1, 0
    %v136 = vsel %vm120, 1, 0
    %v137 = vsel %vm121, 1, 0
    %v138 = vsel %vm122, 1, 0
    %v139 = vsel %vm123, 1, 0
    %v140 = vsel %vm124, 1, 0
    %v141 = vsel %vm125, 1, 0
    %v142 = vsel %vm126, 1, 0
    %v143 = vadd.s32 %v94, %v127
    %v144 = vadd.s32 %v95, %v128
    %v145 = vadd.s32 %v96, %v129
    %v146 = vadd.s32 %v97, %v130
    %v147 = vadd.s32 %v98, %v131
    %v148 = vadd.s32 %v99, %v132
    %v149 = vadd.s32 %v100, %v133
    %v150 = vadd.s32 %v101, %v134
    %v151 = vadd.s32 %v102, %v135
    %v152 = vadd.s32 %v103, %v136
    %v153 = vadd.s32 %v104, %v137
    %v154 = vadd.s32 %v105, %v138
    %v155 = vadd.s32 %v106, %v139
    %v156 = vadd.s32 %v107, %v140
    %v157 = vadd.s32 %v108, %v141
    %v158 = vadd.s32 %v109, %v142
    %v159 = vperm.slane %v60, 1
    %vm160 = vcmp.eq.s32.totalorder %v159, %v62
    %vm161 = vcmp.eq.s32.totalorder %v159, %v63
    %vm162 = vcmp.eq.s32.totalorder %v159, %v64
    %vm163 = vcmp.eq.s32.totalorder %v159, %v65
    %vm164 = vcmp.eq.s32.totalorder %v159, %v66
    %vm165 = vcmp.eq.s32.totalorder %v159, %v67
    %vm166 = vcmp.eq.s32.totalorder %v159, %v68
    %vm167 = vcmp.eq.s32.totalorder %v159, %v69
    %vm168 = vcmp.eq.s32.totalorder %v159, %v70
    %vm169 = vcmp.eq.s32.totalorder %v159, %v71
    %vm170 = vcmp.eq.s32.totalorder %v159, %v72
    %vm171 = vcmp.eq.s32.totalorder %v159, %v73
    %vm172 = vcmp.eq.s32.totalorder %v159, %v74
    %vm173 = vcmp.eq.s32.totalorder %v159, %v75
    %vm174 = vcmp.eq.s32.totalorder %v159, %v76
    %vm175 = vcmp.eq.s32.totalorder %v159, %v77
    %v176 = vsel %vm160, 1, 0
    %v177 = vsel %vm161, 1, 0
    %v178 = vsel %vm162, 1, 0
    %v179 = vsel %vm163, 1, 0
    %v180 = vsel %vm164, 1, 0
    %v181 = vsel %vm165, 1, 0
    %v182 = vsel %vm166, 1, 0
    %v183 = vsel %vm167, 1, 0
    %v184 = vsel %vm168, 1, 0
    %v185 = vsel %vm169, 1, 0
    %v186 = vsel %vm170, 1, 0
    %v187 = vsel %vm171, 1, 0
    %v188 = vsel %vm172, 1, 0
    %v189 = vsel %vm173, 1, 0
    %v190 = vsel %vm174, 1, 0
    %v191 = vsel %vm175, 1, 0
    %v192 = vadd.s32 %v143, %v176
    %v193 = vadd.s32 %v144, %v177
    %v194 = vadd.s32 %v145, %v178
    %v195 = vadd.s32 %v146, %v179
    %v196 = vadd.s32 %v147, %v180
    %v197 = vadd.s32 %v148, %v181
    %v198 = vadd.s32 %v149, %v182
    %v199 = vadd.s32 %v150, %v183
    %v200 = vadd.s32 %v151, %v184
    %v201 = vadd.s32 %v152, %v185
    %v202 = vadd.s32 %v153, %v186
    %v203 = vadd.s32 %v154, %v187
    %v204 = vadd.s32 %v155, %v188
    %v205 = vadd.s32 %v156, %v189
    %v206 = vadd.s32 %v157, %v190
    %v207 = vadd.s32 %v158, %v191
    %v208 = vperm.slane %v60, 2
    %vm209 = vcmp.eq.s32.totalorder %v208, %v62
    %vm210 = vcmp.eq.s32.totalorder %v208, %v63
    %vm211 = vcmp.eq.s32.totalorder %v208, %v64
    %vm212 = vcmp.eq.s32.totalorder %v208, %v65
    %vm213 = vcmp.eq.s32.totalorder %v208, %v66
    %vm214 = vcmp.eq.s32.totalorder %v208, %v67
    %vm215 = vcmp.eq.s32.totalorder %v208, %v68
    %vm216 = vcmp.eq.s32.totalorder %v208, %v69
    %vm217 = vcmp.eq.s32.totalorder %v208, %v70
    %vm218 = vcmp.eq.s32.totalorder %v208, %v71
    %vm219 = vcmp.eq.s32.totalorder %v208, %v72
    %vm220 = vcmp.eq.s32.totalorder %v208, %v73
    %vm221 = vcmp.eq.s32.totalorder %v208, %v74
    %vm222 = vcmp.eq.s32.totalorder %v208, %v75
    %vm223 = vcmp.eq.s32.totalorder %v208, %v76
    %vm224 = vcmp.eq.s32.totalorder %v208, %v77
    %v225 = vsel %vm209, 1, 0
    %v226 = vsel %vm210, 1, 0
    %v227 = vsel %vm211, 1, 0
    %v228 = vsel %vm212, 1, 0
    %v229 = vsel %vm213, 1, 0
    %v230 = vsel %vm214, 1, 0
    %v231 = vsel %vm215, 1, 0
    %v232 = vsel %vm216, 1, 0
    %v233 = vsel %vm217, 1, 0
    %v234 = vsel %vm218, 1, 0
    %v235 = vsel %vm219, 1, 0
    %v236 = vsel %vm220, 1, 0
    %v237 = vsel %vm221, 1, 0
    %v238 = vsel %vm222, 1, 0
    %v239 = vsel %vm223, 1, 0
    %v240 = vsel %vm224, 1, 0
    %v241 = vadd.s32 %v192, %v225
    %v242 = vadd.s32 %v193, %v226
    %v243 = vadd.s32 %v194, %v227
    %v244 = vadd.s32 %v195, %v228
    %v245 = vadd.s32 %v196, %v229
    %v246 = vadd.s32 %v197, %v230
    %v247 = vadd.s32 %v198, %v231
    %v248 = vadd.s32 %v199, %v232
    %v249 = vadd.s32 %v200, %v233
    %v250 = vadd.s32 %v201, %v234
    %v251 = vadd.s32 %v202, %v235
    %v252 = vadd.s32 %v203, %v236
    %v253 = vadd.s32 %v204, %v237
    %v254 = vadd.s32 %v205, %v238
    %v255 = vadd.s32 %v206, %v239
    %v256 = vadd.s32 %v207, %v240
    %v257 = vperm.slane %v60, 3
    %vm258 = vcmp.eq.s32.totalorder %v257, %v62
    %vm259 = vcmp.eq.s32.totalorder %v257, %v63
    %vm260 = vcmp.eq.s32.totalorder %v257, %v64
    %vm261 = vcmp.eq.s32.totalorder %v257, %v65
    %vm262 = vcmp.eq.s32.totalorder %v257, %v66
    %vm263 = vcmp.eq.s32.totalorder %v257, %v67
    %vm264 = vcmp.eq.s32.totalorder %v257, %v68
    %vm265 = vcmp.eq.s32.totalorder %v257, %v69
    %vm266 = vcmp.eq.s32.totalorder %v257, %v70
    %vm267 = vcmp.eq.s32.totalorder %v257, %v71
    %vm268 = vcmp.eq.s32.totalorder %v257, %v72
    %vm269 = vcmp.eq.s32.totalorder %v257, %v73
    %vm270 = vcmp.eq.s32.totalorder %v257, %v74
    %vm271 = vcmp.eq.s32.totalorder %v257, %v75
    %vm272 = vcmp.eq.s32.totalorder %v257, %v76
    %vm273 = vcmp.eq.s32.totalorder %v257, %v77
    %v274 = vsel %vm258, 1, 0
    %v275 = vsel %vm259, 1, 0
    %v276 = vsel %vm260, 1, 0
    %v277 = vsel %vm261, 1, 0
    %v278 = vsel %vm262, 1, 0
    %v279 = vsel %vm263, 1, 0
    %v280 = vsel %vm264, 1, 0
    %v281 = vsel %vm265, 1, 0
    %v282 = vsel %vm266, 1, 0
    %v283 = vsel %vm267, 1, 0
    %v284 = vsel %vm268, 1, 0
    %v285 = vsel %vm269, 1, 0
    %v286 = vsel %vm270, 1, 0
    %v287 = vsel %vm271, 1, 0
    %v288 = vsel %vm272, 1, 0
    %v289 = vsel %vm273, 1, 0
    %v290 = vadd.s32 %v241, %v274
    %v291 = vadd.s32 %v242, %v275
    %v292 = vadd.s32 %v243, %v276
    %v293 = vadd.s32 %v244, %v277
    %v294 = vadd.s32 %v245, %v278
    %v295 = vadd.s32 %v246, %v279
    %v296 = vadd.s32 %v247, %v280
    %v297 = vadd.s32 %v248, %v281
    %v298 = vadd.s32 %v249, %v282
    %v299 = vadd.s32 %v250, %v283
    %v300 = vadd.s32 %v251, %v284
    %v301 = vadd.s32 %v252, %v285
    %v302 = vadd.s32 %v253, %v286
    %v303 = vadd.s32 %v254, %v287
    %v304 = vadd.s32 %v255, %v288
    %v305 = vadd.s32 %v256, %v289
    %v306 = vperm.slane %v60, 4
    %vm307 = vcmp.eq.s32.totalorder %v306, %v62
    %vm308 = vcmp.eq.s32.totalorder %v306, %v63
    %vm309 = vcmp.eq.s32.totalorder %v306, %v64
    %vm310 = vcmp.eq.s32.totalorder %v306, %v65
    %vm311 = vcmp.eq.s32.totalorder %v306, %v66
    %vm312 = vcmp.eq.s32.totalorder %v306, %v67
    %vm313 = vcmp.eq.s32.totalorder %v306, %v68
    %vm314 = vcmp.eq.s32.totalorder %v306, %v69
    %vm315 = vcmp.eq.s32.totalorder %v306, %v70
    %vm316 = vcmp.eq.s32.totalorder %v306, %v71
    %vm317 = vcmp.eq.s32.totalorder %v306, %v72
    %vm318 = vcmp.eq.s32.totalorder %v306, %v73
    %vm319 = vcmp.eq.s32.totalorder %v306, %v74
    %vm320 = vcmp.eq.s32.totalorder %v306, %v75
    %vm321 = vcmp.eq.s32.totalorder %v306, %v76
    %vm322 = vcmp.eq.s32.totalorder %v306, %v77
    %v323 = vsel %vm307, 1, 0
    %v324 = vsel %vm308, 1, 0
    %v325 = vsel %vm309, 1, 0
    %v326 = vsel %vm310, 1, 0
    %v327 = vsel %vm311, 1, 0
    %v328 = vsel %vm312, 1, 0
    %v329 = vsel %vm313, 1, 0
    %v330 = vsel %vm314, 1, 0
    %v331 = vsel %vm315, 1, 0
    %v332 = vsel %vm316, 1, 0
    %v333 = vsel %vm317, 1, 0
    %v334 = vsel %vm318, 1, 0
    %v335 = vsel %vm319, 1, 0
    %v336 = vsel %vm320, 1, 0
    %v337 = vsel %vm321, 1, 0
    %v338 = vsel %vm322, 1, 0
    %v339 = vadd.s32 %v290, %v323
    %v340 = vadd.s32 %v291, %v324
    %v341 = vadd.s32 %v292, %v325
    %v342 = vadd.s32 %v293, %v326
    %v343 = vadd.s32 %v294, %v327
    %v344 = vadd.s32 %v295, %v328
    %v345 = vadd.s32 %v296, %v329
    %v346 = vadd.s32 %v297, %v330
    %v347 = vadd.s32 %v298, %v331
    %v348 = vadd.s32 %v299, %v332
    %v349 = vadd.s32 %v300, %v333
    %v350 = vadd.s32 %v301, %v334
    %v351 = vadd.s32 %v302, %v335
    %v352 = vadd.s32 %v303, %v336
    %v353 = vadd.s32 %v304, %v337
    %v354 = vadd.s32 %v305, %v338
    %v355 = vperm.slane %v60, 5
    %vm356 = vcmp.eq.s32.totalorder %v355, %v62
    %vm357 = vcmp.eq.s32.totalorder %v355, %v63
    %vm358 = vcmp.eq.s32.totalorder %v355, %v64
    %vm359 = vcmp.eq.s32.totalorder %v355, %v65
    %vm360 = vcmp.eq.s32.totalorder %v355, %v66
    %vm361 = vcmp.eq.s32.totalorder %v355, %v67
    %vm362 = vcmp.eq.s32.totalorder %v355, %v68
    %vm363 = vcmp.eq.s32.totalorder %v355, %v69
    %vm364 = vcmp.eq.s32.totalorder %v355, %v70
    %vm365 = vcmp.eq.s32.totalorder %v355, %v71
    %vm366 = vcmp.eq.s32.totalorder %v355, %v72
    %vm367 = vcmp.eq.s32.totalorder %v355, %v73
    %vm368 = vcmp.eq.s32.totalorder %v355, %v74
    %vm369 = vcmp.eq.s32.totalorder %v355, %v75
    %vm370 = vcmp.eq.s32.totalorder %v355, %v76
    %vm371 = vcmp.eq.s32.totalorder %v355, %v77
    %v372 = vsel %vm356, 1, 0
    %v373 = vsel %vm357, 1, 0
    %v374 = vsel %vm358, 1, 0
    %v375 = vsel %vm359, 1, 0
    %v376 = vsel %vm360, 1, 0
    %v377 = vsel %vm361, 1, 0
    %v378 = vsel %vm362, 1, 0
    %v379 = vsel %vm363, 1, 0
    %v380 = vsel %vm364, 1, 0
    %v381 = vsel %vm365, 1, 0
    %v382 = vsel %vm366, 1, 0
    %v383 = vsel %vm367, 1, 0
    %v384 = vsel %vm368, 1, 0
    %v385 = vsel %vm369, 1, 0
    %v386 = vsel %vm370, 1, 0
    %v387 = vsel %vm371, 1, 0
    %v388 = vadd.s32 %v339, %v372
    %v389 = vadd.s32 %v340, %v373
    %v390 = vadd.s32 %v341, %v374
    %v391 = vadd.s32 %v342, %v375
    %v392 = vadd.s32 %v343, %v376
    %v393 = vadd.s32 %v344, %v377
    %v394 = vadd.s32 %v345, %v378
    %v395 = vadd.s32 %v346, %v379
    %v396 = vadd.s32 %v347, %v380
    %v397 = vadd.s32 %v348, %v381
    %v398 = vadd.s32 %v349, %v382
    %v399 = vadd.s32 %v350, %v383
    %v400 = vadd.s32 %v351, %v384
    %v401 = vadd.s32 %v352, %v385
    %v402 = vadd.s32 %v353, %v386
    %v403 = vadd.s32 %v354, %v387
    %v404 = vperm.slane %v60, 6
    %vm405 = vcmp.eq.s32.totalorder %v404, %v62
    %vm406 = vcmp.eq.s32.totalorder %v404, %v63
    %vm407 = vcmp.eq.s32.totalorder %v404, %v64
    %vm408 = vcmp.eq.s32.totalorder %v404, %v65
    %vm409 = vcmp.eq.s32.totalorder %v404, %v66
    %vm410 = vcmp.eq.s32.totalorder %v404, %v67
    %vm411 = vcmp.eq.s32.totalorder %v404, %v68
    %vm412 = vcmp.eq.s32.totalorder %v404, %v69
    %vm413 = vcmp.eq.s32.totalorder %v404, %v70
    %vm414 = vcmp.eq.s32.totalorder %v404, %v71
    %vm415 = vcmp.eq.s32.totalorder %v404, %v72
    %vm416 = vcmp.eq.s32.totalorder %v404, %v73
    %vm417 = vcmp.eq.s32.totalorder %v404, %v74
    %vm418 = vcmp.eq.s32.totalorder %v404, %v75
    %vm419 = vcmp.eq.s32.totalorder %v404, %v76
    %vm420 = vcmp.eq.s32.totalorder %v404, %v77
    %v421 = vsel %vm405, 1, 0
    %v422 = vsel %vm406, 1, 0
    %v423 = vsel %vm407, 1, 0
    %v424 = vsel %vm408, 1, 0
    %v425 = vsel %vm409, 1, 0
    %v426 = vsel %vm410, 1, 0
    %v427 = vsel %vm411, 1, 0
    %v428 = vsel %vm412, 1, 0
    %v429 = vsel %vm413, 1, 0
    %v430 = vsel %vm414, 1, 0
    %v431 = vsel %vm415, 1, 0
    %v432 = vsel %vm416, 1, 0
    %v433 = vsel %vm417, 1, 0
    %v434 = vsel %vm418, 1, 0
    %v435 = vsel %vm419, 1, 0
    %v436 = vsel %vm420, 1, 0
    %v437 = vadd.s32 %v388, %v421
    %v438 = vadd.s32 %v389, %v422
    %v439 = vadd.s32 %v390, %v423
    %v440 = vadd.s32 %v391, %v424
    %v441 = vadd.s32 %v392, %v425
    %v442 = vadd.s32 %v393, %v426
    %v443 = vadd.s32 %v394, %v427
    %v444 = vadd.s32 %v395, %v428
    %v445 = vadd.s32 %v396, %v429
    %v446 = vadd.s32 %v397, %v430
    %v447 = vadd.s32 %v398, %v431
    %v448 = vadd.s32 %v399, %v432
    %v449 = vadd.s32 %v400, %v433
    %v450 = vadd.s32 %v401, %v434
    %v451 = vadd.s32 %v402, %v435
    %v452 = vadd.s32 %v403, %v436
    %v453 = vperm.slane %v60, 7
    %vm454 = vcmp.eq.s32.totalorder %v453, %v62
    %vm455 = vcmp.eq.s32.totalorder %v453, %v63
    %vm456 = vcmp.eq.s32.totalorder %v453, %v64
    %vm457 = vcmp.eq.s32.totalorder %v453, %v65
    %vm458 = vcmp.eq.s32.totalorder %v453, %v66
    %vm459 = vcmp.eq.s32.totalorder %v453, %v67
    %vm460 = vcmp.eq.s32.totalorder %v453, %v68
    %vm461 = vcmp.eq.s32.totalorder %v453, %v69
    %vm462 = vcmp.eq.s32.totalorder %v453, %v70
    %vm463 = vcmp.eq.s32.totalorder %v453, %v71
    %vm464 = vcmp.eq.s32.totalorder %v453, %v72
    %vm465 = vcmp.eq.s32.totalorder %v453, %v73
    %vm466 = vcmp.eq.s32.totalorder %v453, %v74
    %vm467 = vcmp.eq.s32.totalorder %v453, %v75
    %vm468 = vcmp.eq.s32.totalorder %v453, %v76
    %vm469 = vcmp.eq.s32.totalorder %v453, %v77
    %v470 = vsel %vm454, 1, 0
    %v471 = vsel %vm455, 1, 0
    %v472 = vsel %vm456, 1, 0
    %v473 = vsel %vm457, 1, 0
    %v474 = vsel %vm458, 1, 0
    %v475 = vsel %vm459, 1, 0
    %v476 = vsel %vm460, 1, 0
    %v477 = vsel %vm461, 1, 0
    %v478 = vsel %vm462, 1, 0
    %v479 = vsel %vm463, 1, 0
    %v480 = vsel %vm464, 1, 0
    %v481 = vsel %vm465, 1, 0
    %v482 = vsel %vm466, 1, 0
    %v483 = vsel %vm467, 1, 0
    %v484 = vsel %vm468, 1, 0
    %v485 = vsel %vm469, 1, 0
    %v486 = vadd.s32 %v437, %v470
    %v487 = vadd.s32 %v438, %v471
    %v488 = vadd.s32 %v439, %v472
    %v489 = vadd.s32 %v440, %v473
    %v490 = vadd.s32 %v441, %v474
    %v491 = vadd.s32 %v442, %v475
    %v492 = vadd.s32 %v443, %v476
    %v493 = vadd.s32 %v444, %v477
    %v494 = vadd.s32 %v445, %v478
    %v495 = vadd.s32 %v446, %v479
    %v496 = vadd.s32 %v447, %v480
    %v497 = vadd.s32 %v448, %v481
    %v498 = vadd.s32 %v449, %v482
    %v499 = vadd.s32 %v450, %v483
    %v500 = vadd.s32 %v451, %v484
    %v501 = vadd.s32 %v452, %v485
    %v502 = vcvt.s32.f32 %v486
    %v503 = vcvt.s32.f32 %v487
    %v504 = vcvt.s32.f32 %v488
    %v505 = vcvt.s32.f32 %v489
    %v506 = vcvt.s32.f32 %v490
    %v507 = vcvt.s32.f32 %v491
    %v508 = vcvt.s32.f32 %v492
    %v509 = vcvt.s32.f32 %v493
    %v510 = vcvt.s32.f32 %v494
    %v511 = vcvt.s32.f32 %v495
    %v512 = vcvt.s32.f32 %v496
    %v513 = vcvt.s32.f32 %v497
    %v514 = vcvt.s32.f32 %v498
    %v515 = vcvt.s32.f32 %v499
    %v516 = vcvt.s32.f32 %v500
    %v517 = vcvt.s32.f32 %v501
    %v518 = vld [vmem:[#allocation5] sm:$0xff]
    %v519 = vld [vmem:[#allocation5 + $0x8] sm:$0xff]
    %v520 = vld [vmem:[#allocation5 + $0x10] sm:$0xff]
    %v521 = vld [vmem:[#allocation5 + $0x18] sm:$0xff]
    %v522 = vld [vmem:[#allocation5 + $0x20] sm:$0xff]
    %v523 = vld [vmem:[#allocation5 + $0x28] sm:$0xff]
    %v524 = vld [vmem:[#allocation5 + $0x30] sm:$0xff]
    %v525 = vld [vmem:[#allocation5 + $0x38] sm:$0xff]
    %v526 = vld [vmem:[#allocation5 + $0x40] sm:$0xff]
    %v527 = vld [vmem:[#allocation5 + $0x48] sm:$0xff]
    %v528 = vld [vmem:[#allocation5 + $0x50] sm:$0xff]
    %v529 = vld [vmem:[#allocation5 + $0x58] sm:$0xff]
    %v530 = vld [vmem:[#allocation5 + $0x60] sm:$0xff]
    %v531 = vld [vmem:[#allocation5 + $0x68] sm:$0xff]
    %v532 = vld [vmem:[#allocation5 + $0x70] sm:$0xff]
    %v533 = vld [vmem:[#allocation5 + $0x78] sm:$0xff]
    %534 = vmatpush.msra.mxu0 %v517
    %535 = vmatpush.msra.mxu0 %v516
    %536 = vmatpush.msra.mxu0 %v515
    %537 = vmatpush.msra.mxu0 %v514
    %538 = vmatpush.msra.mxu0 %v513
    %539 = vmatpush.msra.mxu0 %v512
    %540 = vmatpush.msra.mxu0 %v511
    %541 = vmatpush.msra.mxu0 %v510
    %542 = vmatpush.msra.mxu0 %v509
    %543 = vmatpush.msra.mxu0 %v508
    %544 = vmatpush.msra.mxu0 %v507
    %545 = vmatpush.msra.mxu0 %v506
    %546 = vmatpush.msra.mxu0 %v505
    %547 = vmatpush.msra.mxu0 %v504
    %548 = vmatpush.msra.mxu0 %v503
    %549 = vmatpush.msra.mxu0 %v502
    %550 = vmatmul.f32.gmra.mxu0 %v518
    %v551 = vpop.f32.mrf.mxu0
    %v552 = vadd.f32 0.0, %v551
    %553 = vmatmul.f32.gmra.mxu0 %v519
    %v554 = vpop.f32.mrf.mxu0
    %v555 = vadd.f32 0.0, %v554
    %556 = vmatmul.f32.gmra.mxu0 %v520
    %v557 = vpop.f32.mrf.mxu0
    %v558 = vadd.f32 0.0, %v557
    %559 = vmatmul.f32.gmra.mxu0 %v521
    %v560 = vpop.f32.mrf.mxu0
    %v561 = vadd.f32 0.0, %v560
    %562 = vmatmul.f32.gmra.mxu0 %v522
    %v563 = vpop.f32.mrf.mxu0
    %v564 = vadd.f32 0.0, %v563
    %565 = vmatmul.f32.gmra.mxu0 %v523
    %v566 = vpop.f32.mrf.mxu0
    %v567 = vadd.f32 0.0, %v566
    %568 = vmatmul.f32.gmra.mxu0 %v524
    %v569 = vpop.f32.mrf.mxu0
    %v570 = vadd.f32 0.0, %v569
    %571 = vmatmul.f32.gmra.mxu0 %v525
    %v572 = vpop.f32.mrf.mxu0
    %v573 = vadd.f32 0.0, %v572
    %574 = vmatmul.f32.gmra.mxu0 %v526
    %v575 = vpop.f32.mrf.mxu0
    %v576 = vadd.f32 0.0, %v575
    %577 = vmatmul.f32.gmra.mxu0 %v527
    %v578 = vpop.f32.mrf.mxu0
    %v579 = vadd.f32 0.0, %v578
    %580 = vmatmul.f32.gmra.mxu0 %v528
    %v581 = vpop.f32.mrf.mxu0
    %v582 = vadd.f32 0.0, %v581
    %583 = vmatmul.f32.gmra.mxu0 %v529
    %v584 = vpop.f32.mrf.mxu0
    %v585 = vadd.f32 0.0, %v584
    %586 = vmatmul.f32.gmra.mxu0 %v530
    %v587 = vpop.f32.mrf.mxu0
    %v588 = vadd.f32 0.0, %v587
    %589 = vmatmul.f32.gmra.mxu0 %v531
    %v590 = vpop.f32.mrf.mxu0
    %v591 = vadd.f32 0.0, %v590
    %592 = vmatmul.f32.gmra.mxu0 %v532
    %v593 = vpop.f32.mrf.mxu0
    %v594 = vadd.f32 0.0, %v593
    %595 = vmatmul.f32.gmra.mxu0 %v533
    %v596 = vpop.f32.mrf.mxu0
    %v597 = vadd.f32 0.0, %v596
    %598 = vdwg.mxu0
    %v599 = vmax.f32 %v552, 0.0
    %v600 = vmax.f32 %v555, 0.0
    %v601 = vmax.f32 %v558, 0.0
    %v602 = vmax.f32 %v561, 0.0
    %v603 = vmax.f32 %v564, 0.0
    %v604 = vmax.f32 %v567, 0.0
    %v605 = vmax.f32 %v570, 0.0
    %v606 = vmax.f32 %v573, 0.0
    %v607 = vmax.f32 %v576, 0.0
    %v608 = vmax.f32 %v579, 0.0
    %v609 = vmax.f32 %v582, 0.0
    %v610 = vmax.f32 %v585, 0.0
    %v611 = vmax.f32 %v588, 0.0
    %v612 = vmax.f32 %v591, 0.0
    %v613 = vmax.f32 %v594, 0.0
    %v614 = vmax.f32 %v597, 0.0
    %v615 = vld [vmem:[#allocation7] sm:$0xff]
    %v616 = vld [vmem:[#allocation7 + $0x8] sm:$0xff]
    %617 = vmatpush.msra.mxu0 %v614
    %618 = vmatpush.msra.mxu0 %v613
    %619 = vmatpush.msra.mxu0 %v612
    %620 = vmatpush.msra.mxu0 %v611
    %621 = vmatpush.msra.mxu0 %v610
    %622 = vmatpush.msra.mxu0 %v609
    %623 = vmatpush.msra.mxu0 %v608
    %624 = vmatpush.msra.mxu0 %v607
    %625 = vmatpush.msra.mxu0 %v606
    %626 = vmatpush.msra.mxu0 %v605
    %627 = vmatpush.msra.mxu0 %v604
    %628 = vmatpush.msra.mxu0 %v603
    %629 = vmatpush.msra.mxu0 %v602
    %630 = vmatpush.msra.mxu0 %v601
    %631 = vmatpush.msra.mxu0 %v600
    %632 = vmatpush.msra.mxu0 %v599
    %633 = vmatmul.f32.gmra.mxu0 %v615
    %v634 = vpop.f32.mrf.mxu0
    %v635 = vadd.f32 0.0, %v634
    %636 = vmatmul.f32.gmra.mxu0 %v616
    %v637 = vpop.f32.mrf.mxu0
    %v638 = vadd.f32 0.0, %v637
    %639 = vdwg.mxu0
    %640 = vst [vmem:[#allocation8] sm:$0xff] %v635
    %641 = vst [vmem:[#allocation8 + $0x8] sm:$0xff] %v638
    // Predicated region
    $region26: #{tpu_custom_call.1} parent=1 // pred_check
      _
    $region27: #{tpu_custom_call.1} parent=1 // pred_check_branch
      %643 = sbr.rel (0) target = $region29
    $region28: #{tpu_custom_call.1} parent=1 // pred_region
      %645 = vsyncadd [#allocation4], 0
      %s646 = sshll.u32 [#allocation8], 4
      %s647 = int_to_ptr.vmem [resolvable:$true] %s646
      %s648 = sshll.u32 %s3, 4
      %s649 = int_to_ptr.hbm [resolvable:$true] %s648
      %654 = dma.vmem_to_hbm [thread:$0]  %s647, 256, %s649, [#allocation4], 128, 128, 8
    $region29: #{tpu_custom_call.1} parent=1 // pred_fallthru
      _
    // Predicated region
    $region30: #{tpu_custom_call.1} parent=1 // pred_check
      _
    $region31: #{tpu_custom_call.1} parent=1 // pred_check_branch
      %656 = sbr.rel (0) target = $region33
    $region32: #{tpu_custom_call.1} parent=1 // pred_region
      %658 = dma.done [#allocation4], 256
    $region33: #{tpu_custom_call.1} parent=1 // pred_fallthru
      _
    %659 = vsyncpa [#allocation3], 1
    %660 = vsyncpa [#allocation6], 1
    %661 = vsyncpa [#allocation4], 1

</llo_original>
